<compile_context>
chip_gen: v5e
topology: v5e:2x2
jax: 0.10.0
libtpu: 0.0.40
codegen_flags: <defaults>
</compile_context>

<pallas_src>
import math

import jax
import jax.numpy as jnp
from jax.experimental import pallas as pl
from jax.experimental.pallas import tpu as pltpu

_DEF_TILE_BYTES = 2 * 1024 * 1024   # safe everywhere (v5e scoped-VMEM default = 16 MiB)
_V7X_TILE_BYTES = 4 * 1024 * 1024   # 4 bufs x 4 MiB = 16 MiB scoped (< 32 MiB default)
_MIN_SPLIT_BYTES = 512 * 1024       # above this, force >= 2 grid steps (dual-TC v7x)
_SUBLANE = {4: 8, 2: 16, 1: 32}     # sublane packing per itemsize


def _round_up(x: int, m: int) -> int:
    return ((x + m - 1) // m) * m


_TILE_BYTES_CACHE = None


def _tile_bytes() -> int:
    """Per-buffer tile byte budget; bumped on v7x (64 MiB VMEM/TC, ~3.2 TB/s HBM)."""
    global _TILE_BYTES_CACHE
    if _TILE_BYTES_CACHE is None:
        tb = _DEF_TILE_BYTES
        try:
            info = pltpu.get_tpu_info()
            vmem = getattr(info, "vmem_capacity_bytes", None)
            if vmem is not None and vmem <= 64 * 1024 * 1024:   # v7x-class part
                tb = _V7X_TILE_BYTES
        except Exception:
            pass  # conservative default if the query is unavailable
        _TILE_BYTES_CACHE = tb
    return _TILE_BYTES_CACHE


def _temp_scale_kernel(t_ref, x_ref, o_ref):
    # t_ref: (1,) f32 temperature in SMEM; x_ref / o_ref: (tile_R, C) VMEM tile.
    # Exact scalar reciprocal on the scalar path (no per-vreg divide), then a
    # vector multiply carried out in the input dtype with an explicit cast on
    # store (no implicit f32 promotion for bf16 tiles).
    inv = (1.0 / t_ref[0]).astype(x_ref.dtype)
    o_ref[...] = (x_ref[...] * inv).astype(o_ref.dtype)


def temperature_scaling(logits: jax.Array, temperature: jax.Array) -> jax.Array:
    """out = logits / temperature, temperature is the (1,) module parameter."""
    orig_shape = logits.shape
    if logits.ndim == 0:
        R, C = 1, 1
    elif logits.ndim == 1:
        R, C = 1, orig_shape[0]
    else:
        C = orig_shape[-1]
        R = math.prod(orig_shape[:-1])
    # Collapsing leading dims of a row-major array is a free view, not an HBM copy.
    x2d = logits.reshape(R, C)

    itemsize = jnp.dtype(logits.dtype).itemsize
    sub = _SUBLANE.get(itemsize, 8)
    bytes_per_row = max(C * itemsize, 1)
    max_tile_rows = max(sub, (_tile_bytes() // bytes_per_row) // sub * sub)

    total_bytes = R * bytes_per_row
    if total_bytes <= _MIN_SPLIT_BYTES or R <= sub:
        tile_r, grid = R, 1                       # one full-array block (no masking cost)
    else:
        # >= 2 tiles so both v7x TensorCores get work; each tile is a multiple
        # of the sublane pack and capped by the per-buffer byte budget.
        tile_r = max(sub, min(max_tile_rows, _round_up(pl.cdiv(R, 2), sub)))
        if tile_r >= R:
            tile_r, grid = R, 1
        else:
            grid = pl.cdiv(R, tile_r)             # last tile may overhang: writes are masked

    # Temperature as an f32 scalar regardless of its stored precision.
    t = jnp.asarray(temperature, dtype=jnp.float32).reshape((1,))

    out2d = pl.pallas_call(
        _temp_scale_kernel,
        out_shape=jax.ShapeDtypeStruct((R, C), logits.dtype),
        grid=(grid,),
        in_specs=[
            pl.BlockSpec(memory_space=pltpu.SMEM),            # temperature scalar
            pl.BlockSpec((tile_r, C), lambda i: (i, 0)),       # logits row tile, full last dim
        ],
        out_specs=pl.BlockSpec((tile_r, C), lambda i: (i, 0)),
        compiler_params=pltpu.CompilerParams(
            dimension_semantics=("parallel",),
        ),
    )(t, x2d)

    return out2d.reshape(orig_shape)


if __name__ == "__main__":
    key = jax.random.PRNGKey(0)

    # Small classifier-head shape; 1000 classes is NOT a multiple of 128, so this
    # exercises the native-layout (no pad / no slice) path.
    B, C = 8, 1000
    logits = jax.random.normal(key, (B, C), dtype=jnp.float32)
    temperature = jnp.full((1,), 1.5, dtype=jnp.float32)

    out = temperature_scaling(logits, temperature)
    jax.block_until_ready(out)

    ref = logits / temperature
    assert out.shape == ref.shape, "shape mismatch vs reference"
    assert jnp.allclose(out, ref, rtol=1e-6, atol=1e-6), "mismatch vs reference"

    # bf16, 3-D, large-enough-to-tile case: exercises the dtype-aware sublane
    # pack (16) and the >=2-step row grid.
    logits_bf = jax.random.normal(jax.random.PRNGKey(1), (4, 128, 1000), dtype=jnp.bfloat16)
    out_bf = temperature_scaling(logits_bf, temperature)
    jax.block_until_ready(out_bf)

    ref_bf = (logits_bf.astype(jnp.float32) / 1.5).astype(jnp.bfloat16)
    assert out_bf.shape == ref_bf.shape, "bf16 shape mismatch vs reference"
    assert jnp.allclose(out_bf.astype(jnp.float32), ref_bf.astype(jnp.float32),
                        rtol=2e-2, atol=2e-2), "bf16 mismatch vs reference"

    print("KERNEL_OK")
</pallas_src>

<mosaic_0001>
module attributes {stable_mosaic.version = 11 : i64} {
  func.func @_temp_scale_kernel(%arg0: i32, %arg1: memref<1xf32, #tpu.memory_space<smem>>, %arg2: memref<8x1000xf32, #tpu.memory_space<vmem>>, %arg3: memref<8x1000xf32, #tpu.memory_space<vmem>>) attributes {dimension_semantics = [#tpu.dimension_semantics<parallel>], iteration_bounds = array<i64: 1>, scalar_prefetch = 0 : i64, scratch_operands = 0 : i64, tpu.core_type = #tpu.core_type<tc>, window_params = [{transform_indices = @transform_0, window_bounds = array<i64: 1>}, {transform_indices = @transform_1, window_bounds = array<i64: 8, 1000>}, {transform_indices = @transform_2, window_bounds = array<i64: 8, 1000>}]} {
    %c0 = arith.constant 0 : index
    %0 = memref.load %arg1[%c0] : memref<1xf32, #tpu.memory_space<smem>>
    %cst = arith.constant 1.000000e+00 : f32
    %1 = arith.divf %cst, %0 : f32
    %c0_0 = arith.constant 0 : index
    %c0_1 = arith.constant 0 : index
    %2 = vector.load %arg2[%c0_0, %c0_1] : memref<8x1000xf32, #tpu.memory_space<vmem>>, vector<8x1000xf32>
    %3 = vector.broadcast %1 : f32 to vector<8x1000xf32>
    %4 = arith.mulf %2, %3 : vector<8x1000xf32>
    %c0_2 = arith.constant 0 : index
    %c0_3 = arith.constant 0 : index
    %5 = vector.load %arg3[%c0_2, %c0_3] : memref<8x1000xf32, #tpu.memory_space<vmem>>, vector<8x1000xf32>
    tpu.vector_store %arg3[%c0_2, %c0_3], %4 {strides = array<i32>} : memref<8x1000xf32, #tpu.memory_space<vmem>>, vector<8x1000xf32>,
    return
  }
  func.func @transform_0(%arg0: i32) -> i32 {
    %c0_i32 = arith.constant 0 : i32
    %c0_i32_0 = arith.constant 0 : i32
    return %c0_i32 : i32
  }
  func.func @transform_1(%arg0: i32) -> (i32, i32) {
    %c0_i32 = arith.constant 0 : i32
    %c0_i32_0 = arith.constant 0 : i32
    return %arg0, %c0_i32 : i32, i32
  }
  func.func @transform_2(%arg0: i32) -> (i32, i32) {
    %c0_i32 = arith.constant 0 : i32
    %c0_i32_0 = arith.constant 0 : i32
    return %arg0, %c0_i32 : i32, i32
  }
}

</mosaic_0001>

<llo_original>
// kernel: tpu_custom_call.1
$region0: #{tpu_custom_call.1}
  #allocation0 [shape = 'u32[]', space=smem, size = 0x4, offset = 0x4, fixed_abs, tag = 'smem constant byte address 0x4 - core index']
  #allocation1 [shape = 'u32[72,128]{1,0:T(1,128)}', space=vmem, size = 0x9000, scoped, tag = 'internal scratch']
  #allocation2 [shape = 'f32[1]{0:T(128)S(6)}', space=smem, size = 0x200, scoped, tag = 'scoped memory for tpu_custom_call.1']
  %s0 = inlined_call_operand.<no memory space> [shape: f32[1], index: 0, kind: input, shape index: {}]
  %s1 = inlined_call_operand.hbm [shape: f32[8,1000], index: 1, kind: input, shape index: {}]
  %s2 = inlined_call_operand.hbm [shape: f32[8,1000], index: 2, kind: output, shape index: {}]
  %s3 = sld [smem:[#allocation0]]
  $region22: #{tpu_custom_call.1} parent=0
    _
  %s5 = ssub.s32 1, %s3
  %s6 = scalar_select 0, %s5, %s3
  %7 = sst [smem:[#allocation2]] %s0
  $region1: #{tpu_custom_call.1} parent=0
    #allocation3 [shape = 'u8[32768]{0}', space=vmem, size = 0x8000, scoped, tag = 'input window, operand 1, single buffered']
    #allocation4 [shape = 's32[1]{0}', space=sflag, size = 0x4, scoped, tag = 'scoped memory for tpu_custom_call.1']
    #allocation5 [shape = 's32[1]{0}', space=sflag, size = 0x4, scoped, tag = 'scoped memory for tpu_custom_call.1']
    #allocation6 [shape = 'u8[32768]{0}', space=vmem, size = 0x8000, scoped, tag = 'output window, operand 0, single buffered']
    %8 = vsyncpa [#allocation4], 0
    %9 = vsyncpa [#allocation5], 0
    // Predicated region
    $region2: #{tpu_custom_call.1} parent=1 // pred_check
      _
    $region3: #{tpu_custom_call.1} parent=1 // pred_check_branch
      %11 = sbr.rel (0) target = $region5
    $region4: #{tpu_custom_call.1} parent=1 // pred_region
      _
    $region5: #{tpu_custom_call.1} parent=1 // pred_fallthru
      _
    // Predicated region
    $region6: #{tpu_custom_call.1} parent=1 // pred_check
      _
    $region7: #{tpu_custom_call.1} parent=1 // pred_check_branch
      %13 = sbr.rel (0) target = $region9
    $region8: #{tpu_custom_call.1} parent=1 // pred_region
      %15 = vsyncadd [#allocation4], 0
      %s17 = sshll.u32 %s1, 4
      %s18 = int_to_ptr.hbm [resolvable:$true] %s17
      %s19 = sshll.u32 [#allocation3], 4
      %s20 = int_to_ptr.vmem [resolvable:$true] %s19
      %22 = dma.hbm_to_vmem [thread:$0]  %s18, 1024, %s20, [#allocation4]
    $region9: #{tpu_custom_call.1} parent=1 // pred_fallthru
      _
    // Predicated region
    $region10: #{tpu_custom_call.1} parent=1 // pred_check
      _
    $region11: #{tpu_custom_call.1} parent=1 // pred_check_branch
      %24 = sbr.rel (0) target = $region13
    $region12: #{tpu_custom_call.1} parent=1 // pred_region
      %26 = dma.done [#allocation4], 1024
    $region13: #{tpu_custom_call.1} parent=1 // pred_fallthru
      _
    %s27 = sld [smem:[#allocation2]]
    %v28 = vstv %s27
    %v29 = vrcp.pop %v28
    %v30 = vmul.f32 %v28, %v29
    %v31 = vsub.f32 1.0, %v30
    %v32 = vmul.f32 %v29, %v31
    %v33 = vadd.f32 %v29, %v32
    %vm34 = vweird.f32 %v28
    %vm35 = vweird.f32 %v29
    %vm36 = vmor %vm34, %vm35
    %v37 = vsel %vm36, %v29, %v33
    %v38 = vand.u32 2147483647, %v28
    %vm39 = vcmp.eq.f32.partialorder %v38, 8.507059e+37
    %v40 = vand.u32 %v28, 2147483648
    %v41 = vor.u32 1.1754944e-38, %v40
    %v42 = vsel %vm39, %v41, %v37
    %s43 = vtos %v42
    %v44 = vld [vmem:[#allocation3] sm:$0xff]
    %v45 = vld [vmem:[#allocation3 + $0x8] sm:$0xff]
    %v46 = vld [vmem:[#allocation3 + $0x10] sm:$0xff]
    %v47 = vld [vmem:[#allocation3 + $0x18] sm:$0xff]
    %v48 = vld [vmem:[#allocation3 + $0x20] sm:$0xff]
    %v49 = vld [vmem:[#allocation3 + $0x28] sm:$0xff]
    %v50 = vld [vmem:[#allocation3 + $0x30] sm:$0xff]
    %v51 = vld [vmem:[#allocation3 + $0x38] sm:$0xff]
    %v52 = vstv %s43
    %v53 = vmul.f32 %v44, %v52
    %v54 = vmul.f32 %v45, %v52
    %v55 = vmul.f32 %v46, %v52
    %v56 = vmul.f32 %v47, %v52
    %v57 = vmul.f32 %v48, %v52
    %v58 = vmul.f32 %v49, %v52
    %v59 = vmul.f32 %v50, %v52
    %v60 = vmul.f32 %v51, %v52
    %61 = vst [vmem:[#allocation6] sm:$0xff] %v53
    %62 = vst [vmem:[#allocation6 + $0x8] sm:$0xff] %v54
    %63 = vst [vmem:[#allocation6 + $0x10] sm:$0xff] %v55
    %64 = vst [vmem:[#allocation6 + $0x18] sm:$0xff] %v56
    %65 = vst [vmem:[#allocation6 + $0x20] sm:$0xff] %v57
    %66 = vst [vmem:[#allocation6 + $0x28] sm:$0xff] %v58
    %67 = vst [vmem:[#allocation6 + $0x30] sm:$0xff] %v59
    %vm68 = vcmask 850944
    %69 = vst.msk [vmem:[#allocation6 + $0x38] sm:$0xff] %vm68, %v60
    // Predicated region
    $region14: #{tpu_custom_call.1} parent=1 // pred_check
      _
    $region15: #{tpu_custom_call.1} parent=1 // pred_check_branch
      %71 = sbr.rel (0) target = $region17
    $region16: #{tpu_custom_call.1} parent=1 // pred_region
      %73 = vsyncadd [#allocation5], 0
      %s75 = sshll.u32 [#allocation6], 4
      %s76 = int_to_ptr.vmem [resolvable:$true] %s75
      %s77 = sshll.u32 %s2, 4
      %s78 = int_to_ptr.hbm [resolvable:$true] %s77
      %80 = dma.vmem_to_hbm [thread:$0]  %s76, 1024, %s78, [#allocation5]
    $region17: #{tpu_custom_call.1} parent=1 // pred_fallthru
      _
    // Predicated region
    $region18: #{tpu_custom_call.1} parent=1 // pred_check
      _
    $region19: #{tpu_custom_call.1} parent=1 // pred_check_branch
      %82 = sbr.rel (0) target = $region21
    $region20: #{tpu_custom_call.1} parent=1 // pred_region
      %84 = dma.done [#allocation5], 1024
    $region21: #{tpu_custom_call.1} parent=1 // pred_fallthru
      _
    %85 = vsyncpa [#allocation4], 1
    %86 = vsyncpa [#allocation5], 1

</llo_original>
